<compile_context>
chip_gen: v5e
topology: v5e:2x2
jax: 0.10.0
libtpu: 0.0.40
codegen_flags: <defaults>
</compile_context>

<pallas_src>
import functools

import jax
import jax.numpy as jnp
from jax.experimental import pallas as pl
from jax.experimental.pallas import tpu as pltpu


# ---------------------------------------------------------------------------
# chip / sizing helpers
# ---------------------------------------------------------------------------

def _device_kind():
    try:
        return jax.devices()[0].device_kind.lower()
    except Exception:
        return ""


def _vmem_budget_bytes():
    """Scoped-VMEM budget: physical capacity minus generous headroom.

    v7x has 64 MiB VMEM per TensorCore, v5e/v6e have 128 MiB.  Leave ~32 MiB
    of headroom for compiler scratch / spills (staying within 16 MiB of the
    physical capacity risks spill-to-VMEM or compile-time OOM)."""
    cap = 64 << 20
    try:
        cap = pltpu.get_tpu_info().vmem_capacity_bytes
    except Exception:
        pass
    return int(min(max(cap - (32 << 20), 24 << 20), 96 << 20))


def _num_tensorcores():
    """v7x exposes 2 TensorCores per chip ('parallel' grid axes shard across
    them); v5e / v6e expose 1."""
    kind = _device_kind()
    return 2 if ("v7" in kind or "7x" in kind) else 1


def _softmax_dtype():
    """bf16 elementwise softmax where the VPU/EUP have a native bf16 path
    (v6e, v7x); keep f32 on v5e and older, where a bf16 path only adds
    converts."""
    kind = _device_kind()
    if any(tag in kind for tag in ("v6", "v7", "7x")):
        return jnp.bfloat16
    return jnp.float32


def _row_tile(n, cap, align=8):
    """Largest row tile <= cap that is a multiple of `align` and divides n.

    Falls back to 8-alignment and finally to n itself (a block spanning the
    full dimension is always layout-legal)."""
    cap = max(min(cap, n), 1)
    for a in (align, 8):
        t = cap - cap % a
        while t >= a:
            if n % t == 0:
                return t
            t -= a
    return n


def _attn_row_tile(n_src, hf, heads, budget, sm_bytes):
    """Destination-row tile for the attention kernel, sized from the VMEM
    budget.  The grid-resident (double-buffered) el / Z blocks are the fixed
    cost; the int8 adjacency tile, live softmax temporaries and the output /
    accumulator blocks scale with rows per tile.  32-aligned for clean int8
    (32, 128) sublane tiling of the adjacency DMA."""
    fixed = 2 * (4 * heads * n_src) + 2 * (2 * n_src * hf)   # el(f32) + Z(bf16), x2 bufs
    per_row = (
        2 * n_src                        # int8 adjacency tile, double-buffered
        + (4 + 4 * sm_bytes) * n_src     # f32 bias + ~4 live (TM, N) softmax temps
        + 2 * 4 * hf + 8 * hf            # output block (x2 bufs) + f32 accumulator
        + 2 * 4 * heads                  # er block
    )
    cap = (budget - fixed) // per_row
    return _row_tile(n_src, int(max(cap, 32)), align=32)


def _cap_for_cores(n, tile, align):
    """Ensure the row grid has at least one step per TensorCore so 'parallel'
    sharding doesn't idle a core (matters on v7x; no-op on v5e/v6e)."""
    cores = _num_tensorcores()
    if cores > 1 and n // tile < cores and n >= cores * align:
        return _row_tile(n, n // cores, align)
    return tile


# ---------------------------------------------------------------------------
# kernels
# ---------------------------------------------------------------------------

def gat_proj_kernel(x_ref, w_ref, a_ref, z_ref, s_ref):
    """Fused projection: Z = x @ W_all (bf16 out, f32 accumulate) plus the
    per-head attention scores s = [el | er] = Z @ [A_l | A_r] computed from
    the freshly produced accumulator, so Z is never re-read from HBM."""
    z = jnp.dot(x_ref[...], w_ref[...], preferred_element_type=jnp.float32)
    zb = z.astype(jnp.bfloat16)
    z_ref[...] = zb
    s_ref[...] = jnp.dot(zb, a_ref[...], preferred_element_type=jnp.float32)


def gat_attn_kernel(er_ref, el_ref, z_ref, adj_ref, out_ref, *,
                    num_heads, feat, sm_dtype):
    """Masked-softmax attention + aggregation for one tile of destination rows.

    er_ref  : (TM, H)    dst attention scores for this row tile (f32)
    el_ref  : (H, 1, N)  src attention scores for all nodes (f32)
    z_ref   : (N, H*F)   projected features (bf16), heads concatenated
    adj_ref : (TM, N)    int8 edge mask, adj[i, j] != 0  <=>  edge j -> i
    out_ref : (TM, H*F)  heads concatenated (single lane-dense store)
    """
    hf = num_heads * feat
    # Mask hoisted out of the head loop as an additive bias: one select per
    # tile instead of per head.  exp(bias - m) underflows to exactly 0, so no
    # second select is needed.  (A row with no in-edge degrades to a uniform
    # average instead of NaN; callers include self-loops, as in the demo.)
    bias = jnp.where(adj_ref[...] > 0, 0.0, -1e30).astype(sm_dtype)
    z = z_ref[...]                                         # (N, H*F) bf16
    er_all = er_ref[...]                                   # (TM, H)  f32
    lane = jax.lax.broadcasted_iota(jnp.int32, (1, hf), 1)
    acc = jnp.zeros(out_ref.shape, jnp.float32)
    for h in range(num_heads):                             # static unroll, small H
        e = er_all[:, h:h + 1].astype(sm_dtype) + el_ref[h].astype(sm_dtype)
        e = jnp.maximum(e, 0.2 * e) + bias                 # LeakyReLU(0.2) + mask
        m = jnp.max(e, axis=-1, keepdims=True)             # (TM, 1)
        p = jnp.exp(e - m)                                 # (TM, N), masked -> 0
        denom = jnp.sum(p, axis=-1, keepdims=True, dtype=jnp.float32)
        # Full-width matmul (TM,N)x(N,H*F): same MXU pass count as a per-head
        # (N,F) slab while H*F <= MXU lane width, avoids unaligned column
        # slices of Z and lane-narrow per-head stores.  1/denom is folded into
        # the result via the EUP approx reciprocal (denominator kept in f32).
        ph = jnp.dot(p.astype(jnp.bfloat16), z,
                     preferred_element_type=jnp.float32)   # (TM, H*F)
        ph = ph * pl.reciprocal(denom, approx=True)
        head_cols = (lane >= h * feat) & (lane < (h + 1) * feat)
        acc = acc + jnp.where(head_cols, ph, 0.0)
    out_ref[...] = acc.astype(out_ref.dtype)               # single lane-dense store


# ---------------------------------------------------------------------------
# wrappers
# ---------------------------------------------------------------------------

def gat_conv(x, adj_mask, W, al, ar, out_dtype=jnp.float32):
    """One GATConv layer (eval mode, heads concatenated).

    x        : (N, Din) float32 / bfloat16 node features
    adj_mask : (N, N)   int8, adj_mask[i, j] != 0  <=>  edge j -> i
    W        : (H, Din, F) per-head projections
    al / ar  : (H, 1, F)   per-head attention vectors (src / dst)
    returns  : (N, H*F) in `out_dtype`
    """
    H, Din, F = W.shape
    N = x.shape[0]
    HF = H * F
    budget = _vmem_budget_bytes()
    sm_dtype = _softmax_dtype()

    # ---- fused projection + attention scores -------------------------------
    # Weights / attention vectors are grid-invariant: pre-cast to bf16 once in
    # the wrapper (halves their HBM + VMEM footprint, no per-tile converts).
    W_all = jnp.transpose(W, (1, 0, 2)).reshape(Din, HF).astype(jnp.bfloat16)
    eyeH = jnp.eye(H, dtype=jnp.float32)
    A_l = (al.reshape(H, F, 1) * eyeH.reshape(H, 1, H)).reshape(HF, H)
    A_r = (ar.reshape(H, F, 1) * eyeH.reshape(H, 1, H)).reshape(HF, H)
    A_all = jnp.concatenate([A_l, A_r], axis=1).astype(jnp.bfloat16)  # (HF, 2H)
    x_bf = x.astype(jnp.bfloat16)

    tm_p = _cap_for_cores(N, _row_tile(N, 512), 8)
    Z, scores = pl.pallas_call(
        gat_proj_kernel,
        out_shape=(jax.ShapeDtypeStruct((N, HF), jnp.bfloat16),
                   jax.ShapeDtypeStruct((N, 2 * H), jnp.float32)),
        grid=(N // tm_p,),
        in_specs=[pl.BlockSpec((tm_p, Din), lambda i: (i, 0)),
                  pl.BlockSpec((Din, HF), lambda i: (0, 0)),
                  pl.BlockSpec((HF, 2 * H), lambda i: (0, 0))],
        out_specs=[pl.BlockSpec((tm_p, HF), lambda i: (i, 0)),
                   pl.BlockSpec((tm_p, 2 * H), lambda i: (i, 0))],
        compiler_params=pltpu.CompilerParams(
            dimension_semantics=("parallel",),
            vmem_limit_bytes=budget),
        cost_estimate=pl.CostEstimate(
            flops=2 * N * HF * (Din + 2 * H),
            transcendentals=0,
            bytes_accessed=2 * (N * Din + Din * HF + N * HF) + 8 * N * H),
    )(x_bf, W_all, A_all)

    # el / er are tiny (N x H); reshaping them for broadcast costs nothing
    # compared with the Z re-reads the fusion above removed.
    el = scores[:, :H].T.reshape(H, 1, N)     # (H, 1, N) src scores
    er = scores[:, H:]                        # (N, H)    dst scores

    # ---- masked-softmax attention + aggregation, row-tiled over dst nodes --
    tm = _attn_row_tile(N, HF, H, budget, jnp.dtype(sm_dtype).itemsize)
    tm = _cap_for_cores(N, tm, 32)
    # TODO(synk): for graphs where the resident Z / el blocks no longer fit in
    # VMEM (large N, earliest on v7x's 64 MiB), add a source-axis tile with
    # flash-style online softmax; resident-Z is the right trade-off here.
    out = pl.pallas_call(
        functools.partial(gat_attn_kernel, num_heads=H, feat=F, sm_dtype=sm_dtype),
        out_shape=jax.ShapeDtypeStruct((N, HF), out_dtype),
        grid=(N // tm,),
        in_specs=[
            pl.BlockSpec((tm, H), lambda i: (i, 0)),        # er (dst scores)
            pl.BlockSpec((H, 1, N), lambda i: (0, 0, 0)),   # el (src scores, resident)
            pl.BlockSpec((N, HF), lambda i: (0, 0)),        # Z  (bf16, resident)
            pl.BlockSpec((tm, N), lambda i: (i, 0)),        # int8 adjacency tile
        ],
        out_specs=pl.BlockSpec((tm, HF), lambda i: (i, 0)),
        compiler_params=pltpu.CompilerParams(
            dimension_semantics=("parallel",),
            vmem_limit_bytes=budget),
        cost_estimate=pl.CostEstimate(
            flops=2 * H * N * N * HF + 8 * H * N * N,
            transcendentals=H * N * N,
            bytes_accessed=N * N + 2 * N * HF + 12 * N * H
                           + N * HF * jnp.dtype(out_dtype).itemsize),
    )(er, el, Z, adj_mask)
    return out


def gat_forward(adj, features, params):
    """Two-layer GAT forward pass; dropout layers are identity (eval mode)."""
    # adjacency compressed to an int8 edge mask once (4x less HBM traffic).
    adj_mask = (adj > 0).astype(jnp.int8)
    h = features
    n_layers = len(params)
    for li, (W, al, ar) in enumerate(params):
        # Hidden activations stay bf16 between layers (the next layer's
        # projection consumes bf16 anyway); only the final layer emits f32.
        out_dtype = jnp.float32 if li == n_layers - 1 else jnp.bfloat16
        h = gat_conv(h, adj_mask, W, al, ar, out_dtype=out_dtype)
    return h


def init_params(key, in_dim, hidden_dim, out_dim, num_heads):
    dims = [(in_dim, hidden_dim), (hidden_dim * num_heads, out_dim)]
    params = []
    for (din, dout) in dims:
        key, k1, k2, k3 = jax.random.split(key, 4)
        scale = 1.0 / jnp.sqrt(jnp.float32(din))
        W = jax.random.normal(k1, (num_heads, din, dout), jnp.float32) * scale
        al = jax.random.normal(k2, (num_heads, 1, dout), jnp.float32) * 0.1
        ar = jax.random.normal(k3, (num_heads, 1, dout), jnp.float32) * 0.1
        params.append((W, al, ar))
    return params


if __name__ == "__main__":
    # small, deterministic setup
    N = 128        # number of graph nodes
    in_dim = 32
    hidden_dim = 16
    out_dim = 8
    num_heads = 4

    key = jax.random.PRNGKey(0)
    k_feat, k_adj, k_param = jax.random.split(key, 3)

    features = jax.random.normal(k_feat, (N, in_dim), jnp.float32)

    # random dense adjacency with guaranteed self-loops (softmax well-defined)
    adj = (jax.random.uniform(k_adj, (N, N)) < 0.4).astype(jnp.float32)
    adj = jnp.maximum(adj, jnp.eye(N, dtype=jnp.float32))

    params = init_params(k_param, in_dim, hidden_dim, out_dim, num_heads)

    out = gat_forward(adj, features, params)
    out = jax.block_until_ready(out)

    assert out.shape == (N, num_heads * out_dim), out.shape
    assert jnp.all(jnp.isfinite(out))
    print("KERNEL_OK")
</pallas_src>

<mosaic_0001>
module attributes {stable_mosaic.version = 11 : i64} {
  func.func @gat_proj_kernel(%arg0: i32, %arg1: memref<128x32xbf16, #tpu.memory_space<vmem>>, %arg2: memref<32x64xbf16, #tpu.memory_space<vmem>>, %arg3: memref<64x8xbf16, #tpu.memory_space<vmem>>, %arg4: memref<128x64xbf16, #tpu.memory_space<vmem>>, %arg5: memref<128x8xf32, #tpu.memory_space<vmem>>) attributes {dimension_semantics = [#tpu.dimension_semantics<parallel>], iteration_bounds = array<i64: 1>, scalar_prefetch = 0 : i64, scratch_operands = 0 : i64, tpu.core_type = #tpu.core_type<tc>, window_params = [{transform_indices = @transform_0, window_bounds = array<i64: 128, 32>}, {pipeline_mode = #tpu.pipeline_mode<synchronous>, transform_indices = @transform_1, window_bounds = array<i64: 32, 64>}, {pipeline_mode = #tpu.pipeline_mode<synchronous>, transform_indices = @transform_2, window_bounds = array<i64: 64, 8>}, {transform_indices = @transform_3, window_bounds = array<i64: 128, 64>}, {transform_indices = @transform_4, window_bounds = array<i64: 128, 8>}]} {
    %c0 = arith.constant 0 : index
    %c0_0 = arith.constant 0 : index
    %0 = vector.load %arg1[%c0, %c0_0] : memref<128x32xbf16, #tpu.memory_space<vmem>>, vector<128x32xbf16>
    %c0_1 = arith.constant 0 : index
    %c0_2 = arith.constant 0 : index
    %1 = vector.load %arg2[%c0_1, %c0_2] : memref<32x64xbf16, #tpu.memory_space<vmem>>, vector<32x64xbf16>
    %cst = arith.constant dense<0.000000e+00> : vector<128x64xf32>
    %2 = tpu.matmul %0, %1, %cst {dimension_numbers = #tpu.dot_dimension_numbers<[1], [0], [0], [1], [0, 0, 1, 1], [], []>} : vector<128x32xbf16>, vector<32x64xbf16>, vector<128x64xf32> -> vector<128x64xf32>
    %3 = arith.truncf %2 : vector<128x64xf32> to vector<128x64xbf16>
    %c0_3 = arith.constant 0 : index
    %c0_4 = arith.constant 0 : index
    %4 = vector.load %arg4[%c0_3, %c0_4] : memref<128x64xbf16, #tpu.memory_space<vmem>>, vector<128x64xbf16>
    tpu.vector_store %arg4[%c0_3, %c0_4], %3 {strides = array<i32>} : memref<128x64xbf16, #tpu.memory_space<vmem>>, vector<128x64xbf16>,
    %c0_5 = arith.constant 0 : index
    %c0_6 = arith.constant 0 : index
    %5 = vector.load %arg3[%c0_5, %c0_6] : memref<64x8xbf16, #tpu.memory_space<vmem>>, vector<64x8xbf16>
    %cst_7 = arith.constant dense<0.000000e+00> : vector<128x8xf32>
    %6 = tpu.matmul %3, %5, %cst_7 {dimension_numbers = #tpu.dot_dimension_numbers<[1], [0], [0], [1], [0, 0, 1, 1], [], []>} : vector<128x64xbf16>, vector<64x8xbf16>, vector<128x8xf32> -> vector<128x8xf32>
    %c0_8 = arith.constant 0 : index
    %c0_9 = arith.constant 0 : index
    %7 = vector.load %arg5[%c0_8, %c0_9] : memref<128x8xf32, #tpu.memory_space<vmem>>, vector<128x8xf32>
    tpu.vector_store %arg5[%c0_8, %c0_9], %6 {strides = array<i32>} : memref<128x8xf32, #tpu.memory_space<vmem>>, vector<128x8xf32>,
    return
  }
  func.func @transform_0(%arg0: i32) -> (i32, i32) {
    %c0_i32 = arith.constant 0 : i32
    %c0_i32_0 = arith.constant 0 : i32
    return %arg0, %c0_i32 : i32, i32
  }
  func.func @transform_1(%arg0: i32) -> (i32, i32) {
    %c0_i32 = arith.constant 0 : i32
    %c0_i32_0 = arith.constant 0 : i32
    %c0_i32_1 = arith.constant 0 : i32
    return %c0_i32, %c0_i32_0 : i32, i32
  }
  func.func @transform_2(%arg0: i32) -> (i32, i32) {
    %c0_i32 = arith.constant 0 : i32
    %c0_i32_0 = arith.constant 0 : i32
    %c0_i32_1 = arith.constant 0 : i32
    return %c0_i32, %c0_i32_0 : i32, i32
  }
  func.func @transform_3(%arg0: i32) -> (i32, i32) {
    %c0_i32 = arith.constant 0 : i32
    %c0_i32_0 = arith.constant 0 : i32
    return %arg0, %c0_i32 : i32, i32
  }
  func.func @transform_4(%arg0: i32) -> (i32, i32) {
    %c0_i32 = arith.constant 0 : i32
    %c0_i32_0 = arith.constant 0 : i32
    return %arg0, %c0_i32 : i32, i32
  }
}

</mosaic_0001>

<llo_original>
// kernel: tpu_custom_call.1
$region0: #{tpu_custom_call.1}
  #allocation0 [shape = 'u32[]', space=smem, size = 0x4, offset = 0x4, fixed_abs, tag = 'smem constant byte address 0x4 - core index']
  #allocation1 [shape = 'u32[72,128]{1,0:T(1,128)}', space=vmem, size = 0x9000, scoped, tag = 'internal scratch']
  %s0 = inlined_call_operand.vmem [shape: bf16[128,32], index: 0, kind: input, shape index: {}]
  %s1 = inlined_call_operand.vmem [shape: bf16[32,64], index: 1, kind: input, shape index: {}]
  %s2 = inlined_call_operand.vmem [shape: bf16[64,8], index: 2, kind: input, shape index: {}]
  %s3 = inlined_call_operand.vmem [shape: bf16[128,64], index: 3, kind: output, shape index: {0}]
  %s4 = inlined_call_operand.vmem [shape: f32[128,8], index: 4, kind: output, shape index: {1}]
  %5 = xla_tuple %s3, %s4
  %s6 = sld [smem:[#allocation0]]
  $region30: #{tpu_custom_call.1} parent=0
    _
  %s8 = ssub.s32 1, %s6
  %s9 = scalar_select 0, %s8, %s6
  // Predicated region
  $region2: #{tpu_custom_call.1} parent=0 // pred_check
    _
  $region3: #{tpu_custom_call.1} parent=0 // pred_check_branch
    %11 = sbr.rel (0) target = $region5
  $region4: #{tpu_custom_call.1} parent=0 // pred_region
    _
  $region5: #{tpu_custom_call.1} parent=0 // pred_fallthru
    _
  // Predicated region
  $region6: #{tpu_custom_call.1} parent=0 // pred_check
    _
  $region7: #{tpu_custom_call.1} parent=0 // pred_check_branch
    %13 = sbr.rel (0) target = $region9
  $region8: #{tpu_custom_call.1} parent=0 // pred_region
    _
  $region9: #{tpu_custom_call.1} parent=0 // pred_fallthru
    _
  // Predicated region
  $region10: #{tpu_custom_call.1} parent=0 // pred_check
    _
  $region11: #{tpu_custom_call.1} parent=0 // pred_check_branch
    %15 = sbr.rel (0) target = $region13
  $region12: #{tpu_custom_call.1} parent=0 // pred_region
    _
  $region13: #{tpu_custom_call.1} parent=0 // pred_fallthru
    _
  %v17 = vld [vmem:[%s0] sm:$0xf]
  %v18 = vld [vmem:[%s0 + $0x4] sm:$0xf]
  %v19 = vld [vmem:[%s0 + $0x8] sm:$0xf]
  %v20 = vld [vmem:[%s0 + $0xc] sm:$0xf]
  %v21 = vld [vmem:[%s0 + $0x10] sm:$0xf]
  %v22 = vld [vmem:[%s0 + $0x14] sm:$0xf]
  %v23 = vld [vmem:[%s0 + $0x18] sm:$0xf]
  %v24 = vld [vmem:[%s0 + $0x1c] sm:$0xf]
  %v25 = vld [vmem:[%s0 + $0x20] sm:$0xf]
  %v26 = vld [vmem:[%s0 + $0x24] sm:$0xf]
  %v27 = vld [vmem:[%s0 + $0x28] sm:$0xf]
  %v28 = vld [vmem:[%s0 + $0x2c] sm:$0xf]
  %v29 = vld [vmem:[%s0 + $0x30] sm:$0xf]
  %v30 = vld [vmem:[%s0 + $0x34] sm:$0xf]
  %v31 = vld [vmem:[%s0 + $0x38] sm:$0xf]
  %v32 = vld [vmem:[%s0 + $0x3c] sm:$0xf]
  %v33 = vld [vmem:[%s1] sm:$0xf]
  %v34 = vld [vmem:[%s1 + $0x4] sm:$0xf]
  %v35 = vld [vmem:[%s1 + $0x8] sm:$0xf]
  %v36 = vld [vmem:[%s1 + $0xc] sm:$0xf]
  %v53 = vunpack.c.l.b16 %v17
  %v54 = vunpack.c.l.b16 %v18
  %v55 = vunpack.c.l.b16 %v19
  %v56 = vunpack.c.l.b16 %v20
  %v57 = vunpack.c.l.b16 %v21
  %v58 = vunpack.c.l.b16 %v22
  %v59 = vunpack.c.l.b16 %v23
  %v60 = vunpack.c.l.b16 %v24
  %v61 = vunpack.c.l.b16 %v25
  %v62 = vunpack.c.l.b16 %v26
  %v63 = vunpack.c.l.b16 %v27
  %v64 = vunpack.c.l.b16 %v28
  %v65 = vunpack.c.l.b16 %v29
  %v66 = vunpack.c.l.b16 %v30
  %v67 = vunpack.c.l.b16 %v31
  %v68 = vunpack.c.l.b16 %v32
  %v69 = vpack.c.b16 %v54, %v53
  %v70 = vpack.c.b16 %v56, %v55
  %v71 = vpack.c.b16 %v58, %v57
  %v72 = vpack.c.b16 %v60, %v59
  %v73 = vpack.c.b16 %v62, %v61
  %v74 = vpack.c.b16 %v64, %v63
  %v75 = vpack.c.b16 %v66, %v65
  %v76 = vpack.c.b16 %v68, %v67
  %v81 = vunpack.c.l.b16 %v33
  %v82 = vunpack.c.l.b16 %v34
  %v83 = vunpack.c.l.b16 %v35
  %v84 = vunpack.c.l.b16 %v36
  %v85 = vpack.c.b16 %v82, %v81
  %v86 = vpack.c.b16 %v84, %v83
  %vm89 = vcmask 261120
  %v91 = vsel %vm89, %v69, 0
  %v94 = vsel %vm89, %v70, 0
  %v97 = vsel %vm89, %v71, 0
  %v100 = vsel %vm89, %v72, 0
  %v103 = vsel %vm89, %v73, 0
  %v106 = vsel %vm89, %v74, 0
  %v109 = vsel %vm89, %v75, 0
  %v112 = vsel %vm89, %v76, 0
  %114 = vmatpush.bf16.msra.mxu0 0
  %115 = vmatpush.bf16.msra.mxu0 0
  %116 = vmatpush.bf16.msra.mxu0 0
  %117 = vmatpush.bf16.msra.mxu0 0
  %118 = vmatpush.bf16.msra.mxu0 0
  %119 = vmatpush.bf16.msra.mxu0 0
  %120 = vmatpush.bf16.msra.mxu0 %v86
  %121 = vmatpush.bf16.msra.mxu0 %v85
  %122 = vmatmul.bf16.gmra.mxu0 %v91
  %v123 = vpop.f32.mrf.mxu0
  %v124 = vadd.f32 0.0, %v123
  %v125 = vpop.f32.mrf.mxu0
  %v126 = vadd.f32 0.0, %v125
  %127 = vmatmul.bf16.gmra.mxu0 %v94
  %v128 = vpop.f32.mrf.mxu0
  %v129 = vadd.f32 0.0, %v128
  %v130 = vpop.f32.mrf.mxu0
  %v131 = vadd.f32 0.0, %v130
  %132 = vmatmul.bf16.gmra.mxu0 %v97
  %v133 = vpop.f32.mrf.mxu0
  %v134 = vadd.f32 0.0, %v133
  %v135 = vpop.f32.mrf.mxu0
  %v136 = vadd.f32 0.0, %v135
  %137 = vmatmul.bf16.gmra.mxu0 %v100
  %v138 = vpop.f32.mrf.mxu0
  %v139 = vadd.f32 0.0, %v138
  %v140 = vpop.f32.mrf.mxu0
  %v141 = vadd.f32 0.0, %v140
  %142 = vmatmul.bf16.gmra.mxu0 %v103
  %v143 = vpop.f32.mrf.mxu0
  %v144 = vadd.f32 0.0, %v143
  %v145 = vpop.f32.mrf.mxu0
  %v146 = vadd.f32 0.0, %v145
  %147 = vmatmul.bf16.gmra.mxu0 %v106
  %v148 = vpop.f32.mrf.mxu0
  %v149 = vadd.f32 0.0, %v148
  %v150 = vpop.f32.mrf.mxu0
  %v151 = vadd.f32 0.0, %v150
  %152 = vmatmul.bf16.gmra.mxu0 %v109
  %v153 = vpop.f32.mrf.mxu0
  %v154 = vadd.f32 0.0, %v153
  %v155 = vpop.f32.mrf.mxu0
  %v156 = vadd.f32 0.0, %v155
  %157 = vmatmul.bf16.gmra.mxu0 %v112
  %v158 = vpop.f32.mrf.mxu0
  %v159 = vadd.f32 0.0, %v158
  %v160 = vpop.f32.mrf.mxu0
  %v161 = vadd.f32 0.0, %v160
  %162 = vdwg.mxu0
  %v163 = vpack.c.bf16 %v124, %v124
  %v164 = vpack.c.bf16 %v126, %v126
  %v165 = vpack.c.bf16 %v129, %v129
  %v166 = vpack.c.bf16 %v131, %v131
  %v167 = vpack.c.bf16 %v134, %v134
  %v168 = vpack.c.bf16 %v136, %v136
  %v169 = vpack.c.bf16 %v139, %v139
  %v170 = vpack.c.bf16 %v141, %v141
  %v171 = vpack.c.bf16 %v144, %v144
  %v172 = vpack.c.bf16 %v146, %v146
  %v173 = vpack.c.bf16 %v149, %v149
  %v174 = vpack.c.bf16 %v151, %v151
  %v175 = vpack.c.bf16 %v154, %v154
  %v176 = vpack.c.bf16 %v156, %v156
  %v177 = vpack.c.bf16 %v159, %v159
  %v178 = vpack.c.bf16 %v161, %v161
  %vm179 = vcmask 519168
  %180 = vst.msk [vmem:[%s3] sm:$0xf] %vm179, %v163
  %181 = vst.msk [vmem:[%s3 + $0x4] sm:$0xf] %vm179, %v164
  %182 = vst.msk [vmem:[%s3 + $0x8] sm:$0xf] %vm179, %v165
  %183 = vst.msk [vmem:[%s3 + $0xc] sm:$0xf] %vm179, %v166
  %184 = vst.msk [vmem:[%s3 + $0x10] sm:$0xf] %vm179, %v167
  %185 = vst.msk [vmem:[%s3 + $0x14] sm:$0xf] %vm179, %v168
  %186 = vst.msk [vmem:[%s3 + $0x18] sm:$0xf] %vm179, %v169
  %187 = vst.msk [vmem:[%s3 + $0x1c] sm:$0xf] %vm179, %v170
  %188 = vst.msk [vmem:[%s3 + $0x20] sm:$0xf] %vm179, %v171
  %189 = vst.msk [vmem:[%s3 + $0x24] sm:$0xf] %vm179, %v172
  %190 = vst.msk [vmem:[%s3 + $0x28] sm:$0xf] %vm179, %v173
  %191 = vst.msk [vmem:[%s3 + $0x2c] sm:$0xf] %vm179, %v174
  %192 = vst.msk [vmem:[%s3 + $0x30] sm:$0xf] %vm179, %v175
  %193 = vst.msk [vmem:[%s3 + $0x34] sm:$0xf] %vm179, %v176
  %194 = vst.msk [vmem:[%s3 + $0x38] sm:$0xf] %vm179, %v177
  %195 = vst.msk [vmem:[%s3 + $0x3c] sm:$0xf] %vm179, %v178
  %v196 = vld [vmem:[%s2] sm:$0xf]
  %v197 = vld [vmem:[%s2 + $0x4] sm:$0xf]
  %v198 = vld [vmem:[%s2 + $0x8] sm:$0xf]
  %v199 = vld [vmem:[%s2 + $0xc] sm:$0xf]
  %v200 = vld [vmem:[%s2 + $0x10] sm:$0xf]
  %v201 = vld [vmem:[%s2 + $0x14] sm:$0xf]
  %v202 = vld [vmem:[%s2 + $0x18] sm:$0xf]
  %v203 = vld [vmem:[%s2 + $0x1c] sm:$0xf]
  %v220 = vunpack.c.l.b16 %v163
  %v221 = vunpack.c.l.b16 %v164
  %v222 = vunpack.c.l.b16 %v165
  %v223 = vunpack.c.l.b16 %v166
  %v224 = vunpack.c.l.b16 %v167
  %v225 = vunpack.c.l.b16 %v168
  %v226 = vunpack.c.l.b16 %v169
  %v227 = vunpack.c.l.b16 %v170
  %v228 = vunpack.c.l.b16 %v171
  %v229 = vunpack.c.l.b16 %v172
  %v230 = vunpack.c.l.b16 %v173
  %v231 = vunpack.c.l.b16 %v174
  %v232 = vunpack.c.l.b16 %v175
  %v233 = vunpack.c.l.b16 %v176
  %v234 = vunpack.c.l.b16 %v177
  %v235 = vunpack.c.l.b16 %v178
  %v236 = vpack.c.b16 %v221, %v220
  %v237 = vpack.c.b16 %v223, %v222
  %v238 = vpack.c.b16 %v225, %v224
  %v239 = vpack.c.b16 %v227, %v226
  %v240 = vpack.c.b16 %v229, %v228
  %v241 = vpack.c.b16 %v231, %v230
  %v242 = vpack.c.b16 %v233, %v232
  %v243 = vpack.c.b16 %v235, %v234
  %v252 = vunpack.c.l.b16 %v196
  %v253 = vunpack.c.l.b16 %v197
  %v254 = vunpack.c.l.b16 %v198
  %v255 = vunpack.c.l.b16 %v199
  %v256 = vunpack.c.l.b16 %v200
  %v257 = vunpack.c.l.b16 %v201
  %v258 = vunpack.c.l.b16 %v202
  %v259 = vunpack.c.l.b16 %v203
  %v260 = vpack.c.b16 %v253, %v252
  %v261 = vpack.c.b16 %v255, %v254
  %v262 = vpack.c.b16 %v257, %v256
  %v263 = vpack.c.b16 %v259, %v258
  %vm268 = vcmask 523264
  %v270 = vsel %vm268, %v236, 0
  %v273 = vsel %vm268, %v237, 0
  %v276 = vsel %vm268, %v238, 0
  %v279 = vsel %vm268, %v239, 0
  %v282 = vsel %vm268, %v240, 0
  %v285 = vsel %vm268, %v241, 0
  %v288 = vsel %vm268, %v242, 0
  %v291 = vsel %vm268, %v243, 0
  %293 = vmatpush.bf16.msra.mxu0 0
  %294 = vmatpush.bf16.msra.mxu0 0
  %295 = vmatpush.bf16.msra.mxu0 0
  %296 = vmatpush.bf16.msra.mxu0 0
  %297 = vmatpush.bf16.msra.mxu0 %v263
  %298 = vmatpush.bf16.msra.mxu0 %v262
  %299 = vmatpush.bf16.msra.mxu0 %v261
  %300 = vmatpush.bf16.msra.mxu0 %v260
  %301 = vmatmul.bf16.gmra.mxu0 %v270
  %v302 = vpop.f32.mrf.mxu0
  %v303 = vadd.f32 0.0, %v302
  %v304 = vpop.f32.mrf.mxu0
  %v305 = vadd.f32 0.0, %v304
  %306 = vmatmul.bf16.gmra.mxu0 %v273
  %v307 = vpop.f32.mrf.mxu0
  %v308 = vadd.f32 0.0, %v307
  %v309 = vpop.f32.mrf.mxu0
  %v310 = vadd.f32 0.0, %v309
  %311 = vmatmul.bf16.gmra.mxu0 %v276
  %v312 = vpop.f32.mrf.mxu0
  %v313 = vadd.f32 0.0, %v312
  %v314 = vpop.f32.mrf.mxu0
  %v315 = vadd.f32 0.0, %v314
  %316 = vmatmul.bf16.gmra.mxu0 %v279
  %v317 = vpop.f32.mrf.mxu0
  %v318 = vadd.f32 0.0, %v317
  %v319 = vpop.f32.mrf.mxu0
  %v320 = vadd.f32 0.0, %v319
  %321 = vmatmul.bf16.gmra.mxu0 %v282
  %v322 = vpop.f32.mrf.mxu0
  %v323 = vadd.f32 0.0, %v322
  %v324 = vpop.f32.mrf.mxu0
  %v325 = vadd.f32 0.0, %v324
  %326 = vmatmul.bf16.gmra.mxu0 %v285
  %v327 = vpop.f32.mrf.mxu0
  %v328 = vadd.f32 0.0, %v327
  %v329 = vpop.f32.mrf.mxu0
  %v330 = vadd.f32 0.0, %v329
  %331 = vmatmul.bf16.gmra.mxu0 %v288
  %v332 = vpop.f32.mrf.mxu0
  %v333 = vadd.f32 0.0, %v332
  %v334 = vpop.f32.mrf.mxu0
  %v335 = vadd.f32 0.0, %v334
  %336 = vmatmul.bf16.gmra.mxu0 %v291
  %v337 = vpop.f32.mrf.mxu0
  %v338 = vadd.f32 0.0, %v337
  %v339 = vpop.f32.mrf.mxu0
  %v340 = vadd.f32 0.0, %v339
  %341 = vdwg.mxu0
  %vm342 = vcmask 64512
  %343 = vst.msk [vmem:[%s4] sm:$0xff] %vm342, %v303
  %344 = vst.msk [vmem:[%s4 + $0x8] sm:$0xff] %vm342, %v305
  %345 = vst.msk [vmem:[%s4 + $0x10] sm:$0xff] %vm342, %v308
  %346 = vst.msk [vmem:[%s4 + $0x18] sm:$0xff] %vm342, %v310
  %347 = vst.msk [vmem:[%s4 + $0x20] sm:$0xff] %vm342, %v313
  %348 = vst.msk [vmem:[%s4 + $0x28] sm:$0xff] %vm342, %v315
  %349 = vst.msk [vmem:[%s4 + $0x30] sm:$0xff] %vm342, %v318
  %350 = vst.msk [vmem:[%s4 + $0x38] sm:$0xff] %vm342, %v320
  %351 = vst.msk [vmem:[%s4 + $0x40] sm:$0xff] %vm342, %v323
  %352 = vst.msk [vmem:[%s4 + $0x48] sm:$0xff] %vm342, %v325
  %353 = vst.msk [vmem:[%s4 + $0x50] sm:$0xff] %vm342, %v328
  %354 = vst.msk [vmem:[%s4 + $0x58] sm:$0xff] %vm342, %v330
  %355 = vst.msk [vmem:[%s4 + $0x60] sm:$0xff] %vm342, %v333
  %356 = vst.msk [vmem:[%s4 + $0x68] sm:$0xff] %vm342, %v335
  %357 = vst.msk [vmem:[%s4 + $0x70] sm:$0xff] %vm342, %v338
  %358 = vst.msk [vmem:[%s4 + $0x78] sm:$0xff] %vm342, %v340
  // Predicated region
  $region14: #{tpu_custom_call.1} parent=0 // pred_check
    _
  $region15: #{tpu_custom_call.1} parent=0 // pred_check_branch
    %360 = sbr.rel (0) target = $region17
  $region16: #{tpu_custom_call.1} parent=0 // pred_region
    _
  $region17: #{tpu_custom_call.1} parent=0 // pred_fallthru
    _
  // Predicated region
  $region18: #{tpu_custom_call.1} parent=0 // pred_check
    _
  $region19: #{tpu_custom_call.1} parent=0 // pred_check_branch
    %362 = sbr.rel (0) target = $region21
  $region20: #{tpu_custom_call.1} parent=0 // pred_region
    _
  $region21: #{tpu_custom_call.1} parent=0 // pred_fallthru
    _
  // Predicated region
  $region22: #{tpu_custom_call.1} parent=0 // pred_check
    _
  $region23: #{tpu_custom_call.1} parent=0 // pred_check_branch
    %364 = sbr.rel (0) target = $region25
  $region24: #{tpu_custom_call.1} parent=0 // pred_region
    _
  $region25: #{tpu_custom_call.1} parent=0 // pred_fallthru
    _
  // Predicated region
  $region26: #{tpu_custom_call.1} parent=0 // pred_check
    _
  $region27: #{tpu_custom_call.1} parent=0 // pred_check_branch
    %366 = sbr.rel (0) target = $region29
  $region28: #{tpu_custom_call.1} parent=0 // pred_region
    _
  $region29: #{tpu_custom_call.1} parent=0 // pred_fallthru
    _

</llo_original>
